<compile_context>
chip_gen: v7x
topology: tpu7x:2x2x1
jax: 0.10.0
libtpu: 0.0.40
codegen_flags: <defaults>
</compile_context>

<pallas_src>
import functools

import jax
import jax.numpy as jnp
from jax.experimental import pallas as pl
from jax.experimental.pallas import tpu as pltpu

LANE = 128
MAX_BATCH_TILE = 4096   # rows per grid step (multiple of 16); amortizes step overhead
MIN_SPLIT_ROWS = 128    # below this, don't bother splitting the batch into >=2 steps


def _round_up(n: int, m: int) -> int:
    return ((n + m - 1) // m) * m


def _qnetwork_kernel(x_ref, w1_ref, w23_ref, b_ref, o_ref):
    # x:   (TB, dim_obs)   f32  (cast to bf16 here to feed the MXU natively)
    # w1:  (dim_obs, H)    bf16
    # w23: (2, H, H)       bf16 (row 0 = W2, row 1 = W3, zero-padded)
    # b:   (3, H)          f32  (rows = b1, b2, b3, zero-padded)
    # o:   (TB, OUT_COLS)  f32  (narrow store; wrapper slices num_actions cols)
    x = x_ref[...].astype(jnp.bfloat16)
    h = jnp.dot(x, w1_ref[...], preferred_element_type=jnp.float32) + b_ref[0:1, :]
    h = jnp.maximum(h, 0.0).astype(jnp.bfloat16)
    h = jnp.dot(h, w23_ref[0], preferred_element_type=jnp.float32) + b_ref[1:2, :]
    h = jnp.maximum(h, 0.0).astype(jnp.bfloat16)
    out = jnp.dot(h, w23_ref[1], preferred_element_type=jnp.float32) + b_ref[2:3, :]
    # Keep the matmul 128-wide (MXU quadrant), store only the real output lanes.
    o_ref[...] = out[:, : o_ref.shape[1]]


@functools.partial(jax.jit, static_argnames=("num_actions",))
def qnetwork_forward(x, w1p, w23p, bp, *, num_actions):
    """x: (batch, dim_obs) f32.  w1p/w23p bf16, bp f32 (see pack_qnetwork_params)."""
    batch, dim_obs = x.shape
    hp = w1p.shape[1]                                  # padded hidden width (128)
    out_cols = min(hp, _round_up(num_actions, 8))      # narrow stored output width

    # Batch tiling: pad to a multiple of 16 (bf16-friendly sublanes).
    pb = _round_up(batch, 16)
    if pb <= MIN_SPLIT_ROWS:
        # Tiny batch: one grid step; splitting would only add step overhead.
        tb = pb
    else:
        # Keep >= 2 grid steps so v7x's two TensorCores both get work
        # ("parallel" batch axis); cap tile size to amortize step overhead.
        tb = min(MAX_BATCH_TILE, _round_up((pb + 1) // 2, 16))
        pb = _round_up(batch, tb)
    if pb != batch:
        x = jnp.pad(x, ((0, pb - batch), (0, 0)))

    grid = (pb // tb,)

    flops = 2 * pb * (dim_obs * hp + hp * hp + hp * hp)
    bytes_accessed = (
        pb * dim_obs * 4          # x in (f32)
        + w1p.size * 2            # W1 (bf16)
        + w23p.size * 2           # W2/W3 (bf16)
        + bp.size * 4             # biases (f32)
        + pb * out_cols * 4       # narrow f32 output
    )

    out = pl.pallas_call(
        _qnetwork_kernel,
        out_shape=jax.ShapeDtypeStruct((pb, out_cols), jnp.float32),
        grid=grid,
        in_specs=[
            pl.BlockSpec((tb, dim_obs), lambda i: (i, 0)),       # x: tiled over batch
            pl.BlockSpec((dim_obs, hp), lambda i: (0, 0)),       # W1: VMEM-resident
            pl.BlockSpec((2, hp, hp), lambda i: (0, 0, 0)),      # W2/W3: VMEM-resident
            pl.BlockSpec((3, hp), lambda i: (0, 0)),             # biases: VMEM-resident
        ],
        out_specs=pl.BlockSpec((tb, out_cols), lambda i: (i, 0)),  # narrow output tile
        compiler_params=pltpu.CompilerParams(
            dimension_semantics=("parallel",),
        ),
        cost_estimate=pl.CostEstimate(
            flops=flops, transcendentals=0, bytes_accessed=bytes_accessed
        ),
    )(x, w1p, w23p, bp)

    return out[:batch, :num_actions]


def init_qnetwork_params(key, dim_observation, num_actions, hidden_sizes=(120, 84)):
    """PyTorch-Linear-style init U(-1/sqrt(fan_in), 1/sqrt(fan_in)).

    Weights stored (in_features, out_features), i.e. transposed vs PyTorch,
    so y = x @ W + b.  Returns [w1, b1, w2, b2, w3, b3] (unpadded, f32).
    """
    sizes = [dim_observation] + list(hidden_sizes) + [num_actions]
    params = []
    for i in range(len(sizes) - 1):
        fan_in, fan_out = sizes[i], sizes[i + 1]
        key, wk, bk = jax.random.split(key, 3)
        bound = 1.0 / jnp.sqrt(fan_in)
        w = jax.random.uniform(wk, (fan_in, fan_out), jnp.float32, -bound, bound)
        b = jax.random.uniform(bk, (fan_out,), jnp.float32, -bound, bound)
        params.extend([w, b])
    return params


def pack_qnetwork_params(w1, b1, w2, b2, w3, b3):
    """Zero-pad all hidden/output widths to a multiple of 128 and pack operands.

    Returns (w1p bf16 (dim_obs, H), w23p bf16 (2, H, H), bp f32 (3, H)).
    Zero-padding is exact: padded hidden lanes get 0 bias -> ReLU(0)=0 and feed
    zero weight rows; padded output lanes are identically 0 and never stored.
    """
    dim_obs, h1 = w1.shape
    h2 = w2.shape[1]
    nout = w3.shape[1]
    hp = max(_round_up(h1, LANE), _round_up(h2, LANE), _round_up(nout, LANE))

    w1p = jnp.zeros((dim_obs, hp), jnp.float32).at[:, :h1].set(w1)
    w2p = jnp.zeros((hp, hp), jnp.float32).at[:h1, :h2].set(w2)
    w3p = jnp.zeros((hp, hp), jnp.float32).at[:h2, :nout].set(w3)
    w23p = jnp.stack([w2p, w3p], axis=0)

    bp = jnp.zeros((3, hp), jnp.float32)
    bp = bp.at[0, :h1].set(b1).at[1, :h2].set(b2).at[2, :nout].set(b3)

    return w1p.astype(jnp.bfloat16), w23p.astype(jnp.bfloat16), bp


def reference_forward(x, w1, b1, w2, b2, w3, b3):
    h1 = jnp.maximum(x @ w1 + b1, 0.0)
    h2 = jnp.maximum(h1 @ w2 + b2, 0.0)
    return h2 @ w3 + b3


if __name__ == "__main__":
    key = jax.random.PRNGKey(0)
    dim_observation = 4   # CartPole observation dim
    num_actions = 2       # CartPole action dim
    batch = 8

    key, xk = jax.random.split(key)
    x = jax.random.normal(xk, (batch, dim_observation), jnp.float32)

    params = init_qnetwork_params(key, dim_observation, num_actions)
    w1p, w23p, bp = pack_qnetwork_params(*params)

    out = qnetwork_forward(x, w1p, w23p, bp, num_actions=num_actions)
    out = jax.block_until_ready(out)

    ref = reference_forward(x, *params)
    assert out.shape == (batch, num_actions)
    # bf16 weights/activations on the MXU vs f32 reference -> loose tolerance.
    assert jnp.allclose(out, ref, atol=3e-2, rtol=3e-2), "mismatch vs reference"

    # Also exercise the multi-step (>=2 grid iterations) path for correctness.
    key, xk2 = jax.random.split(key)
    big_batch = 300
    x2 = jax.random.normal(xk2, (big_batch, dim_observation), jnp.float32)
    out2 = jax.block_until_ready(
        qnetwork_forward(x2, w1p, w23p, bp, num_actions=num_actions)
    )
    ref2 = reference_forward(x2, *params)
    assert out2.shape == (big_batch, num_actions)
    assert jnp.allclose(out2, ref2, atol=3e-2, rtol=3e-2), "mismatch vs reference (big)"

    print("KERNEL_OK")
</pallas_src>

<mosaic_0001>
module attributes {stable_mosaic.version = 11 : i64} {
  func.func @_qnetwork_kernel(%arg0: i32, %arg1: memref<16x4xf32, #tpu.memory_space<vmem>>, %arg2: memref<4x128xbf16, #tpu.memory_space<vmem>>, %arg3: memref<2x128x128xbf16, #tpu.memory_space<vmem>>, %arg4: memref<3x128xf32, #tpu.memory_space<vmem>>, %arg5: memref<16x8xf32, #tpu.memory_space<vmem>>) attributes {dimension_semantics = [#tpu.dimension_semantics<parallel>], iteration_bounds = array<i64: 1>, scalar_prefetch = 0 : i64, scratch_operands = 0 : i64, tpu.core_type = #tpu.core_type<tc>, window_params = [{transform_indices = @transform_0, window_bounds = array<i64: 16, 4>}, {pipeline_mode = #tpu.pipeline_mode<synchronous>, transform_indices = @transform_1, window_bounds = array<i64: 4, 128>}, {pipeline_mode = #tpu.pipeline_mode<synchronous>, transform_indices = @transform_2, window_bounds = array<i64: 2, 128, 128>}, {pipeline_mode = #tpu.pipeline_mode<synchronous>, transform_indices = @transform_3, window_bounds = array<i64: 3, 128>}, {transform_indices = @transform_4, window_bounds = array<i64: 16, 8>}]} {
    %c0 = arith.constant 0 : index
    %c0_0 = arith.constant 0 : index
    %0 = vector.load %arg1[%c0, %c0_0] : memref<16x4xf32, #tpu.memory_space<vmem>>, vector<16x4xf32>
    %1 = arith.truncf %0 : vector<16x4xf32> to vector<16x4xbf16>
    %c0_1 = arith.constant 0 : index
    %c0_2 = arith.constant 0 : index
    %2 = vector.load %arg2[%c0_1, %c0_2] : memref<4x128xbf16, #tpu.memory_space<vmem>>, vector<4x128xbf16>
    %cst = arith.constant dense<0.000000e+00> : vector<16x128xf32>
    %3 = tpu.matmul %1, %2, %cst {dimension_numbers = #tpu.dot_dimension_numbers<[1], [0], [0], [1], [0, 0, 1, 1], [], []>} : vector<16x4xbf16>, vector<4x128xbf16>, vector<16x128xf32> -> vector<16x128xf32>
    %c0_3 = arith.constant 0 : index
    %c0_4 = arith.constant 0 : index
    %4 = vector.load %arg4[%c0_3, %c0_4] : memref<3x128xf32, #tpu.memory_space<vmem>>, vector<1x128xf32>
    %5 = vector.broadcast %4 : vector<1x128xf32> to vector<16x128xf32>
    %6 = arith.addf %3, %5 : vector<16x128xf32>
    %cst_5 = arith.constant 0.000000e+00 : f32
    %7 = vector.broadcast %cst_5 : f32 to vector<16x128xf32>
    %8 = arith.maximumf %6, %7 : vector<16x128xf32>
    %9 = arith.truncf %8 : vector<16x128xf32> to vector<16x128xbf16>
    %c0_6 = arith.constant 0 : index
    %c0_7 = arith.constant 0 : index
    %c0_8 = arith.constant 0 : index
    %10 = vector.load %arg3[%c0_6, %c0_7, %c0_8] : memref<2x128x128xbf16, #tpu.memory_space<vmem>>, vector<1x128x128xbf16>
    %11 = vector.shape_cast %10 : vector<1x128x128xbf16> to vector<128x128xbf16>
    %cst_9 = arith.constant dense<0.000000e+00> : vector<16x128xf32>
    %12 = tpu.matmul %9, %11, %cst_9 {dimension_numbers = #tpu.dot_dimension_numbers<[1], [0], [0], [1], [0, 0, 1, 1], [], []>} : vector<16x128xbf16>, vector<128x128xbf16>, vector<16x128xf32> -> vector<16x128xf32>
    %c1 = arith.constant 1 : index
    %c0_10 = arith.constant 0 : index
    %13 = vector.load %arg4[%c1, %c0_10] : memref<3x128xf32, #tpu.memory_space<vmem>>, vector<1x128xf32>
    %14 = vector.broadcast %13 : vector<1x128xf32> to vector<16x128xf32>
    %15 = arith.addf %12, %14 : vector<16x128xf32>
    %cst_11 = arith.constant 0.000000e+00 : f32
    %16 = vector.broadcast %cst_11 : f32 to vector<16x128xf32>
    %17 = arith.maximumf %15, %16 : vector<16x128xf32>
    %18 = arith.truncf %17 : vector<16x128xf32> to vector<16x128xbf16>
    %c1_12 = arith.constant 1 : index
    %c0_13 = arith.constant 0 : index
    %c0_14 = arith.constant 0 : index
    %19 = vector.load %arg3[%c1_12, %c0_13, %c0_14] : memref<2x128x128xbf16, #tpu.memory_space<vmem>>, vector<1x128x128xbf16>
    %20 = vector.shape_cast %19 : vector<1x128x128xbf16> to vector<128x128xbf16>
    %cst_15 = arith.constant dense<0.000000e+00> : vector<16x128xf32>
    %21 = tpu.matmul %18, %20, %cst_15 {dimension_numbers = #tpu.dot_dimension_numbers<[1], [0], [0], [1], [0, 0, 1, 1], [], []>} : vector<16x128xbf16>, vector<128x128xbf16>, vector<16x128xf32> -> vector<16x128xf32>
    %c2 = arith.constant 2 : index
    %c0_16 = arith.constant 0 : index
    %22 = vector.load %arg4[%c2, %c0_16] : memref<3x128xf32, #tpu.memory_space<vmem>>, vector<1x128xf32>
    %23 = vector.broadcast %22 : vector<1x128xf32> to vector<16x128xf32>
    %24 = arith.addf %21, %23 : vector<16x128xf32>
    %25 = vector.extract_strided_slice %24 {offsets = [0, 0], sizes = [16, 8], strides = [1, 1]} : vector<16x128xf32> to vector<16x8xf32>
    %c0_17 = arith.constant 0 : index
    %c0_18 = arith.constant 0 : index
    %26 = vector.load %arg5[%c0_17, %c0_18] : memref<16x8xf32, #tpu.memory_space<vmem>>, vector<16x8xf32>
    tpu.vector_store %arg5[%c0_17, %c0_18], %25 {strides = array<i32>} : memref<16x8xf32, #tpu.memory_space<vmem>>, vector<16x8xf32>,
    return
  }
  func.func @transform_0(%arg0: i32) -> (i32, i32) {
    %c0_i32 = arith.constant 0 : i32
    %c0_i32_0 = arith.constant 0 : i32
    return %arg0, %c0_i32 : i32, i32
  }
  func.func @transform_1(%arg0: i32) -> (i32, i32) {
    %c0_i32 = arith.constant 0 : i32
    %c0_i32_0 = arith.constant 0 : i32
    %c0_i32_1 = arith.constant 0 : i32
    return %c0_i32, %c0_i32_0 : i32, i32
  }
  func.func @transform_2(%arg0: i32) -> (i32, i32, i32) {
    %c0_i32 = arith.constant 0 : i32
    %c0_i32_0 = arith.constant 0 : i32
    %c0_i32_1 = arith.constant 0 : i32
    %c0_i32_2 = arith.constant 0 : i32
    return %c0_i32, %c0_i32_0, %c0_i32_1 : i32, i32, i32
  }
  func.func @transform_3(%arg0: i32) -> (i32, i32) {
    %c0_i32 = arith.constant 0 : i32
    %c0_i32_0 = arith.constant 0 : i32
    %c0_i32_1 = arith.constant 0 : i32
    return %c0_i32, %c0_i32_0 : i32, i32
  }
  func.func @transform_4(%arg0: i32) -> (i32, i32) {
    %c0_i32 = arith.constant 0 : i32
    %c0_i32_0 = arith.constant 0 : i32
    return %arg0, %c0_i32 : i32, i32
  }
}

</mosaic_0001>

<llo_original>
// kernel: qnetwork_forward.1
$region0: #{qnetwork_forward.1}
  #allocation0 [shape = 'u32[]', space=smem, size = 0x4, offset = 0x4, fixed_abs, tag = 'smem constant byte address 0x4 - core index']
  #allocation1 [shape = 'u32[144,128]{1,0:T(1,128)}', space=vmem, size = 0x12000, scoped, tag = 'internal scratch']
  %s0 = inlined_call_operand.vmem [shape: f32[16,4], index: 0, kind: input, shape index: {}]
  %s1 = inlined_call_operand.vmem [shape: bf16[4,128], index: 1, kind: input, shape index: {}]
  %s2 = inlined_call_operand.hbm [shape: bf16[2,128,128], index: 2, kind: input, shape index: {}]
  %s3 = inlined_call_operand.vmem [shape: f32[3,128], index: 3, kind: input, shape index: {}]
  %s4 = inlined_call_operand.vmem [shape: f32[16,8], index: 4, kind: output, shape index: {}]
  %s5 = sld [smem:[#allocation0]]
  $region30: #{qnetwork_forward.1} parent=0
    _
  %s7 = ssub.s32 1, %s5
  %s8 = scalar_select 0, %s7, %s5
  $region1: #{qnetwork_forward.1} parent=0
    #allocation2 [shape = 'u8[65536]{0}', space=vmem, size = 0x10000, scoped, tag = 'input window, operand 2, single buffered']
    #allocation3 [shape = 's32[1]{0}', space=sflag, size = 0x4, scoped, tag = 'scoped memory for qnetwork_forward.1']
    %9 = vsyncpa [#allocation3], 0
    // Predicated region
    $region2: #{qnetwork_forward.1} parent=1 // pred_check
      _
    $region3: #{qnetwork_forward.1} parent=1 // pred_check_branch
      %11 = sbr.rel (0) target = $region5
    $region4: #{qnetwork_forward.1} parent=1 // pred_region
      _
    $region5: #{qnetwork_forward.1} parent=1 // pred_fallthru
      _
    // Predicated region
    $region6: #{qnetwork_forward.1} parent=1 // pred_check
      _
    $region7: #{qnetwork_forward.1} parent=1 // pred_check_branch
      %13 = sbr.rel (0) target = $region9
    $region8: #{qnetwork_forward.1} parent=1 // pred_region
      _
    $region9: #{qnetwork_forward.1} parent=1 // pred_fallthru
      _
    // Predicated region
    $region10: #{qnetwork_forward.1} parent=1 // pred_check
      _
    $region11: #{qnetwork_forward.1} parent=1 // pred_check_branch
      %15 = sbr.rel (0) target = $region13
    $region12: #{qnetwork_forward.1} parent=1 // pred_region
      %s17 = ssub.s32 2048, 2048
      %18 = vsyncadd [#allocation3], %s17
      %s19 = sshll.u32 [#allocation2], 4
      %s20 = int_to_ptr.vmem [resolvable:$true] %s19
      %25 = dma.hbm_to_vmem [thread:$0]  %s2, 2048, %s20, [#allocation3], 64, 64, 4
    $region13: #{qnetwork_forward.1} parent=1 // pred_fallthru
      _
    // Predicated region
    $region14: #{qnetwork_forward.1} parent=1 // pred_check
      _
    $region15: #{qnetwork_forward.1} parent=1 // pred_check_branch
      %27 = sbr.rel (0) target = $region17
    $region16: #{qnetwork_forward.1} parent=1 // pred_region
      _
    $region17: #{qnetwork_forward.1} parent=1 // pred_fallthru
      _
    // Predicated region
    $region18: #{qnetwork_forward.1} parent=1 // pred_check
      _
    $region19: #{qnetwork_forward.1} parent=1 // pred_check_branch
      %29 = sbr.rel (0) target = $region21
    $region20: #{qnetwork_forward.1} parent=1 // pred_region
      %30 = dma.done [#allocation3], 2048
    $region21: #{qnetwork_forward.1} parent=1 // pred_fallthru
      _
    %v32 = vld [vmem:[%s0] sm:$0xff]
    %v33 = vld [vmem:[%s0 + $0x8] sm:$0xff]
    %v34 = vpack.c.bf16 %v33, %v32
    %v35 = vld [vmem:[%s1] sm:$0x3]
    %v36 = vld [vmem:[%s3] sm:$0x1]
    %v37 = vlaneseq
    %v38 = vshrl.u32 %v37, 7
    %v39 = vsub.s32 0, %v38
    %v40 = vrot.slane %v36, %v39
    %vm41 = vcmask 31744
    %v43 = vsel %vm41, %v34, 0
    %vm45 = vcmask 1041408
    %v47 = vsel %vm45, %v35, 0
    %49 = vmatprep.subr.bf16.mxu0 0
    %50 = vmatpush1.bf16.msra.mxu0 %v47
    %51 = vmatprep.subr.bf16.mxu0 0
    %52 = vmatpush1.bf16.msra.mxu0 0
    %53 = vmatprep.subr.bf16.mxu0 0
    %54 = vmatpush1.bf16.msra.mxu0 0
    %55 = vmatprep.subr.bf16.mxu0 0
    %56 = vmatpush1.bf16.msra.mxu0 0
    %57 = vmatprep.subr.bf16.mxu0 0
    %58 = vmatpush1.bf16.msra.mxu0 0
    %59 = vmatprep.subr.bf16.mxu0 0
    %60 = vmatpush1.bf16.msra.mxu0 0
    %61 = vmatprep.subr.bf16.mxu0 0
    %62 = vmatpush1.bf16.msra.mxu0 0
    %63 = vmatprep.subr.bf16.mxu0 0
    %64 = vmatpush1.bf16.msra.mxu0 0
    %65 = vmatprep.subr.bf16.mxu0 0
    %66 = vmatpush1.bf16.msra.mxu0 0
    %67 = vmatprep.subr.bf16.mxu0 0
    %68 = vmatpush1.bf16.msra.mxu0 0
    %69 = vmatprep.subr.bf16.mxu0 0
    %70 = vmatpush1.bf16.msra.mxu0 0
    %71 = vmatprep.subr.bf16.mxu0 0
    %72 = vmatpush1.bf16.msra.mxu0 0
    %73 = vmatprep.subr.bf16.mxu0 0
    %74 = vmatpush1.bf16.msra.mxu0 0
    %75 = vmatprep.subr.bf16.mxu0 0
    %76 = vmatpush1.bf16.msra.mxu0 0
    %77 = vmatprep.subr.bf16.mxu0 0
    %78 = vmatpush1.bf16.msra.mxu0 0
    %79 = vmatprep.subr.bf16.mxu0 0
    %80 = vmatpush1.bf16.msra.mxu0 0
    %81 = vmatprep.mubr.bf16.mxu0 0
    %82 = vmatmul.mubr.bf16.gmra.mrb[0].mxu0 %v43
    %v83 = vpop.f32.mrb[0].mxu0
    %v84 = vadd.f32 %v40, %v83
    %v85 = vpop.f32.mrb[0].mxu0
    %v86 = vpop.f32.mrb[0].mxu0
    %v87 = vadd.f32 %v40, %v86
    %v88 = vpop.f32.mrb[0].mxu0
    %89 = vdwg.mxu0
    %v90 = vmax.f32 %v84, 0.0
    %v91 = vmax.f32 %v87, 0.0
    %v92 = vpack.c.bf16 %v91, %v90
    %v93 = vld [vmem:[#allocation2] sm:$0xf]
    %v94 = vld [vmem:[#allocation2 + $0x4] sm:$0xf]
    %v95 = vld [vmem:[#allocation2 + $0x8] sm:$0xf]
    %v96 = vld [vmem:[#allocation2 + $0xc] sm:$0xf]
    %v97 = vld [vmem:[#allocation2 + $0x10] sm:$0xf]
    %v98 = vld [vmem:[#allocation2 + $0x14] sm:$0xf]
    %v99 = vld [vmem:[#allocation2 + $0x18] sm:$0xf]
    %v100 = vld [vmem:[#allocation2 + $0x1c] sm:$0xf]
    %v101 = vld [vmem:[#allocation2 + $0x20] sm:$0xf]
    %v102 = vld [vmem:[#allocation2 + $0x24] sm:$0xf]
    %v103 = vld [vmem:[#allocation2 + $0x28] sm:$0xf]
    %v104 = vld [vmem:[#allocation2 + $0x2c] sm:$0xf]
    %v105 = vld [vmem:[#allocation2 + $0x30] sm:$0xf]
    %v106 = vld [vmem:[#allocation2 + $0x34] sm:$0xf]
    %v107 = vld [vmem:[#allocation2 + $0x38] sm:$0xf]
    %v108 = vld [vmem:[#allocation2 + $0x3c] sm:$0xf]
    %v109 = vld [vmem:[%s3 + $0x1] sm:$0x1]
    %v110 = vlaneseq
    %v111 = vshrl.u32 %v110, 7
    %v112 = vsub.s32 0, %v111
    %v113 = vrot.slane %v109, %v112
    %v130 = vunpack.c.l.b16 %v93
    %v131 = vunpack.c.l.b16 %v94
    %v132 = vunpack.c.l.b16 %v95
    %v133 = vunpack.c.l.b16 %v96
    %v134 = vunpack.c.l.b16 %v97
    %v135 = vunpack.c.l.b16 %v98
    %v136 = vunpack.c.l.b16 %v99
    %v137 = vunpack.c.l.b16 %v100
    %v138 = vunpack.c.l.b16 %v101
    %v139 = vunpack.c.l.b16 %v102
    %v140 = vunpack.c.l.b16 %v103
    %v141 = vunpack.c.l.b16 %v104
    %v142 = vunpack.c.l.b16 %v105
    %v143 = vunpack.c.l.b16 %v106
    %v144 = vunpack.c.l.b16 %v107
    %v145 = vunpack.c.l.b16 %v108
    %v146 = vpack.c.b16 %v131, %v130
    %v147 = vpack.c.b16 %v133, %v132
    %v148 = vpack.c.b16 %v135, %v134
    %v149 = vpack.c.b16 %v137, %v136
    %v150 = vpack.c.b16 %v139, %v138
    %v151 = vpack.c.b16 %v141, %v140
    %v152 = vpack.c.b16 %v143, %v142
    %v153 = vpack.c.b16 %v145, %v144
    %162 = vmatprep.subr.bf16.mxu0 0
    %163 = vmatpush1.bf16.msra.mxu0 %v146
    %164 = vmatprep.subr.bf16.mxu0 0
    %165 = vmatpush1.bf16.msra.mxu0 %v147
    %166 = vmatprep.subr.bf16.mxu0 0
    %167 = vmatpush1.bf16.msra.mxu0 %v148
    %168 = vmatprep.subr.bf16.mxu0 0
    %169 = vmatpush1.bf16.msra.mxu0 %v149
    %170 = vmatprep.subr.bf16.mxu0 0
    %171 = vmatpush1.bf16.msra.mxu0 %v150
    %172 = vmatprep.subr.bf16.mxu0 0
    %173 = vmatpush1.bf16.msra.mxu0 %v151
    %174 = vmatprep.subr.bf16.mxu0 0
    %175 = vmatpush1.bf16.msra.mxu0 %v152
    %176 = vmatprep.subr.bf16.mxu0 0
    %177 = vmatpush1.bf16.msra.mxu0 %v153
    %178 = vmatprep.subr.bf16.mxu0 0
    %179 = vmatpush1.bf16.msra.mxu0 0
    %180 = vmatprep.subr.bf16.mxu0 0
    %181 = vmatpush1.bf16.msra.mxu0 0
    %182 = vmatprep.subr.bf16.mxu0 0
    %183 = vmatpush1.bf16.msra.mxu0 0
    %184 = vmatprep.subr.bf16.mxu0 0
    %185 = vmatpush1.bf16.msra.mxu0 0
    %186 = vmatprep.subr.bf16.mxu0 0
    %187 = vmatpush1.bf16.msra.mxu0 0
    %188 = vmatprep.subr.bf16.mxu0 0
    %189 = vmatpush1.bf16.msra.mxu0 0
    %190 = vmatprep.subr.bf16.mxu0 0
    %191 = vmatpush1.bf16.msra.mxu0 0
    %192 = vmatprep.subr.bf16.mxu0 0
    %193 = vmatpush1.bf16.msra.mxu0 0
    %194 = vmatprep.mubr.bf16.mxu0 0
    %195 = vmatmul.mubr.bf16.gmra.mrb[0].mxu0 %v92
    %v196 = vpop.f32.mrb[0].mxu0
    %v197 = vadd.f32 %v113, %v196
    %v198 = vpop.f32.mrb[0].mxu0
    %v199 = vpop.f32.mrb[0].mxu0
    %v200 = vadd.f32 %v113, %v199
    %v201 = vpop.f32.mrb[0].mxu0
    %202 = vdwg.mxu0
    %v203 = vmax.f32 %v197, 0.0
    %v204 = vmax.f32 %v200, 0.0
    %v205 = vpack.c.bf16 %v204, %v203
    %s206 = scalar_lea.vmem [#allocation2], 64
    %v207 = vld [vmem:[%s206] sm:$0xf]
    %v208 = vld [vmem:[%s206 + $0x4] sm:$0xf]
    %v209 = vld [vmem:[%s206 + $0x8] sm:$0xf]
    %v210 = vld [vmem:[%s206 + $0xc] sm:$0xf]
    %v211 = vld [vmem:[%s206 + $0x10] sm:$0xf]
    %v212 = vld [vmem:[%s206 + $0x14] sm:$0xf]
    %v213 = vld [vmem:[%s206 + $0x18] sm:$0xf]
    %v214 = vld [vmem:[%s206 + $0x1c] sm:$0xf]
    %v215 = vld [vmem:[%s206 + $0x20] sm:$0xf]
    %v216 = vld [vmem:[%s206 + $0x24] sm:$0xf]
    %v217 = vld [vmem:[%s206 + $0x28] sm:$0xf]
    %v218 = vld [vmem:[%s206 + $0x2c] sm:$0xf]
    %v219 = vld [vmem:[%s206 + $0x30] sm:$0xf]
    %v220 = vld [vmem:[%s206 + $0x34] sm:$0xf]
    %v221 = vld [vmem:[%s206 + $0x38] sm:$0xf]
    %v222 = vld [vmem:[%s206 + $0x3c] sm:$0xf]
    %v223 = vld [vmem:[%s3 + $0x2] sm:$0x1]
    %v224 = vlaneseq
    %v225 = vshrl.u32 %v224, 7
    %v226 = vsub.s32 0, %v225
    %v227 = vrot.slane %v223, %v226
    %v244 = vunpack.c.l.b16 %v207
    %v245 = vunpack.c.l.b16 %v208
    %v246 = vunpack.c.l.b16 %v209
    %v247 = vunpack.c.l.b16 %v210
    %v248 = vunpack.c.l.b16 %v211
    %v249 = vunpack.c.l.b16 %v212
    %v250 = vunpack.c.l.b16 %v213
    %v251 = vunpack.c.l.b16 %v214
    %v252 = vunpack.c.l.b16 %v215
    %v253 = vunpack.c.l.b16 %v216
    %v254 = vunpack.c.l.b16 %v217
    %v255 = vunpack.c.l.b16 %v218
    %v256 = vunpack.c.l.b16 %v219
    %v257 = vunpack.c.l.b16 %v220
    %v258 = vunpack.c.l.b16 %v221
    %v259 = vunpack.c.l.b16 %v222
    %v260 = vpack.c.b16 %v245, %v244
    %v261 = vpack.c.b16 %v247, %v246
    %v262 = vpack.c.b16 %v249, %v248
    %v263 = vpack.c.b16 %v251, %v250
    %v264 = vpack.c.b16 %v253, %v252
    %v265 = vpack.c.b16 %v255, %v254
    %v266 = vpack.c.b16 %v257, %v256
    %v267 = vpack.c.b16 %v259, %v258
    %276 = vmatprep.subr.bf16.mxu0 0
    %277 = vmatpush1.bf16.msra.mxu0 %v260
    %278 = vmatprep.subr.bf16.mxu0 0
    %279 = vmatpush1.bf16.msra.mxu0 %v261
    %280 = vmatprep.subr.bf16.mxu0 0
    %281 = vmatpush1.bf16.msra.mxu0 %v262
    %282 = vmatprep.subr.bf16.mxu0 0
    %283 = vmatpush1.bf16.msra.mxu0 %v263
    %284 = vmatprep.subr.bf16.mxu0 0
    %285 = vmatpush1.bf16.msra.mxu0 %v264
    %286 = vmatprep.subr.bf16.mxu0 0
    %287 = vmatpush1.bf16.msra.mxu0 %v265
    %288 = vmatprep.subr.bf16.mxu0 0
    %289 = vmatpush1.bf16.msra.mxu0 %v266
    %290 = vmatprep.subr.bf16.mxu0 0
    %291 = vmatpush1.bf16.msra.mxu0 %v267
    %292 = vmatprep.subr.bf16.mxu0 0
    %293 = vmatpush1.bf16.msra.mxu0 0
    %294 = vmatprep.subr.bf16.mxu0 0
    %295 = vmatpush1.bf16.msra.mxu0 0
    %296 = vmatprep.subr.bf16.mxu0 0
    %297 = vmatpush1.bf16.msra.mxu0 0
    %298 = vmatprep.subr.bf16.mxu0 0
    %299 = vmatpush1.bf16.msra.mxu0 0
    %300 = vmatprep.subr.bf16.mxu0 0
    %301 = vmatpush1.bf16.msra.mxu0 0
    %302 = vmatprep.subr.bf16.mxu0 0
    %303 = vmatpush1.bf16.msra.mxu0 0
    %304 = vmatprep.subr.bf16.mxu0 0
    %305 = vmatpush1.bf16.msra.mxu0 0
    %306 = vmatprep.subr.bf16.mxu0 0
    %307 = vmatpush1.bf16.msra.mxu0 0
    %308 = vmatprep.mubr.bf16.mxu0 0
    %309 = vmatmul.mubr.bf16.gmra.mrb[0].mxu0 %v205
    %v310 = vpop.f32.mrb[0].mxu0
    %v311 = vadd.f32 %v227, %v310
    %v312 = vpop.f32.mrb[0].mxu0
    %v313 = vpop.f32.mrb[0].mxu0
    %v314 = vadd.f32 %v227, %v313
    %v315 = vpop.f32.mrb[0].mxu0
    %316 = vdwg.mxu0
    %vm317 = vcmask 64512
    %318 = vst.msk [vmem:[%s4] sm:$0xff] %vm317, %v311
    %319 = vst.msk [vmem:[%s4 + $0x8] sm:$0xff] %vm317, %v314
    // Predicated region
    $region22: #{qnetwork_forward.1} parent=1 // pred_check
      _
    $region23: #{qnetwork_forward.1} parent=1 // pred_check_branch
      %321 = sbr.rel (0) target = $region25
    $region24: #{qnetwork_forward.1} parent=1 // pred_region
      _
    $region25: #{qnetwork_forward.1} parent=1 // pred_fallthru
      _
    // Predicated region
    $region26: #{qnetwork_forward.1} parent=1 // pred_check
      _
    $region27: #{qnetwork_forward.1} parent=1 // pred_check_branch
      %323 = sbr.rel (0) target = $region29
    $region28: #{qnetwork_forward.1} parent=1 // pred_region
      _
    $region29: #{qnetwork_forward.1} parent=1 // pred_fallthru
      _
    %324 = vsyncpa [#allocation3], 1

</llo_original>
